<compile_context>
chip_gen: v7x
topology: tpu7x:2x2x1
jax: 0.10.0
libtpu: 0.0.40
codegen_flags: <defaults>
</compile_context>

<pallas_src>
import jax
import jax.numpy as jnp
from jax import lax
from jax.experimental import pallas as pl
from jax.experimental.pallas import tpu as pltpu


def _round_up(x, m):
    return ((x + m - 1) // m) * m


# ---------------------------------------------------------------------------
# Path A: table fully VMEM-resident (small tables).
# ---------------------------------------------------------------------------
def _vmem_gather_kernel(ids_ref, table_ref, out_ref):
    """Gather rows from a VMEM-resident table into the output tile.

    ids_ref   : (M_pad,) int32 in SMEM (scalar prefetch)
    table_ref : (V, E) table block, same block every grid step (resident)
    out_ref   : (R, E) output block for this grid step
    """
    n_rows = out_ref.shape[0]
    base = pl.program_id(0) * n_rows

    def body(j, carry):
        tok = ids_ref[base + j]
        out_ref[pl.ds(j, 1), :] = table_ref[pl.ds(tok, 1), :]
        return carry

    lax.fori_loop(0, n_rows, body, 0, unroll=8)


# ---------------------------------------------------------------------------
# Path B: table stays in HBM; manual per-row DMA gather into the output tile.
# ---------------------------------------------------------------------------
def _hbm_gather_kernel(ids_ref, table_hbm_ref, out_ref, sems):
    """DMA-gather rows straight from the HBM table into the output block.

    ids_ref       : (M_pad,) int32 in SMEM (scalar prefetch)
    table_hbm_ref : (V, E) table left in HBM (memory_space=pl.ANY)
    out_ref       : (R, E) VMEM output block
    sems          : (R,) DMA completion semaphores
    """
    n_rows = out_ref.shape[0]
    base = pl.program_id(0) * n_rows

    copies = []
    for j in range(n_rows):          # static unroll: issue all row DMAs back-to-back
        tok = ids_ref[base + j]
        cp = pltpu.make_async_copy(
            table_hbm_ref.at[pl.ds(tok, 1), :],
            out_ref.at[pl.ds(j, 1), :],
            sems.at[j],
        )
        cp.start()
        copies.append(cp)
    for cp in copies:                # wait as a group: all R fetches stay in flight
        cp.wait()


def embeddings_forward(ids, emb_table, *, rows_per_step=None,
                       vmem_table_budget_bytes=48 << 20):
    """Pallas equivalent of Embeddings.forward in eval mode.

    ids       : (B, L) int32 token ids in [0, V)
    emb_table : (V, E) float32 embedding weights (row 0 = padding row)
    returns   : (B, L, E) float32
    """
    B, L = ids.shape
    V, E = emb_table.shape
    dtype = emb_table.dtype
    itemsize = jnp.dtype(dtype).itemsize

    M = B * L
    table_bytes = V * E * itemsize

    # Table-residency decision (budget chosen to be v7x-safe: 64 MiB physical
    # VMEM per TC, keep headroom for double buffering + output tiles).
    use_vmem_table = (2 * table_bytes + (8 << 20)) <= vmem_table_budget_bytes

    # Tokens gathered per grid step.
    if rows_per_step is None:
        rows_per_step = 128 if use_vmem_table else 64
    R = max(8, _round_up(rows_per_step, 8))
    # Keep >= ~8 grid steps when the problem is big enough (feeds both v7x TCs).
    while R > 8 and pl.cdiv(M, R) < 8:
        R //= 2
    R = max(8, _round_up(R, 8))

    M_pad = _round_up(M, R)
    ids_flat = ids.reshape(M).astype(jnp.int32)
    if M_pad != M:
        # Padded slots gather row 0 (the all-zeros padding row); sliced off below.
        ids_flat = jnp.pad(ids_flat, (0, M_pad - M))

    grid = (M_pad // R,)
    out_shape = jax.ShapeDtypeStruct((M_pad, E), dtype)
    out_tile_bytes = R * _round_up(E, 128) * itemsize

    if use_vmem_table:
        need = 2 * table_bytes + 2 * out_tile_bytes + (1 << 20)
        params = dict(dimension_semantics=("parallel",))
        if need > (12 << 20):  # above the smallest default scoped-VMEM limit (v5e)
            params["vmem_limit_bytes"] = int(min(need + (4 << 20), 56 << 20))
        out = pl.pallas_call(
            _vmem_gather_kernel,
            out_shape=out_shape,
            grid_spec=pltpu.PrefetchScalarGridSpec(
                num_scalar_prefetch=1,
                grid=grid,
                # Whole table as one block, constant index_map -> loaded once,
                # resident in VMEM across the grid.
                in_specs=[pl.BlockSpec((V, E), lambda i, ids: (0, 0))],
                out_specs=pl.BlockSpec((R, E), lambda i, ids: (i, 0)),
            ),
            compiler_params=pltpu.CompilerParams(**params),
        )(ids_flat, emb_table)
    else:
        out = pl.pallas_call(
            _hbm_gather_kernel,
            out_shape=out_shape,
            grid_spec=pltpu.PrefetchScalarGridSpec(
                num_scalar_prefetch=1,
                grid=grid,
                in_specs=[pl.BlockSpec(memory_space=pl.ANY)],  # table stays in HBM
                out_specs=pl.BlockSpec((R, E), lambda i, ids: (i, 0)),
                scratch_shapes=[pltpu.SemaphoreType.DMA((R,))],
            ),
            compiler_params=pltpu.CompilerParams(
                dimension_semantics=("parallel",),
            ),
        )(ids_flat, emb_table)

    if M_pad != M:
        out = out[:M]
    return out.reshape(B, L, E)


if __name__ == "__main__":
    # Small synthetic config consistent with the module:
    #   vocab_size + 1 rows, embedding_size columns, padding_idx = 0.
    B = 2      # batch
    L = 8      # sequence length (Config.max_length = 72, scaled down)
    E = 300    # Config.embedding_size (kept at the real, non-128-multiple width)
    V = 256    # vocab_size + 1 (scaled down)

    key = jax.random.PRNGKey(0)
    k_emb, k_ids = jax.random.split(key)

    # Deterministic "loaded" embedding weights; row 0 is the padding row
    # (zeros), mirroring embedding_matrix[0] = np.zeros(embedding_size).
    emb_table = jax.random.normal(k_emb, (V, E), dtype=jnp.float32)
    emb_table = emb_table.at[0].set(0.0)

    ids = jax.random.randint(k_ids, (B, L), minval=0, maxval=V, dtype=jnp.int32)

    # Pure-JAX reference (exact eval-mode forward).
    ref = jnp.take(emb_table, ids, axis=0)

    # Path A: small table -> VMEM-resident fast path.
    out_vmem = jax.block_until_ready(embeddings_forward(ids, emb_table))
    assert out_vmem.shape == (B, L, E)
    assert jnp.allclose(out_vmem, ref, atol=0.0), "VMEM path mismatch vs reference"

    # Path B: force the HBM DMA row-gather path (what the real 120k x 300
    # table would take) by setting the residency budget to zero.
    out_hbm = jax.block_until_ready(
        embeddings_forward(ids, emb_table, vmem_table_budget_bytes=0))
    assert out_hbm.shape == (B, L, E)
    assert jnp.allclose(out_hbm, ref, atol=0.0), "HBM path mismatch vs reference"

    print("KERNEL_OK")
</pallas_src>

<mosaic_0001>
module attributes {stable_mosaic.version = 11 : i64} {
  func.func @_vmem_gather_kernel(%arg0: i32, %arg1: memref<16xi32, #tpu.memory_space<smem>>, %arg2: memref<256x300xf32, #tpu.memory_space<vmem>>, %arg3: memref<8x300xf32, #tpu.memory_space<vmem>>) attributes {dimension_semantics = [#tpu.dimension_semantics<parallel>], iteration_bounds = array<i64: 2>, scalar_prefetch = 1 : i64, scratch_operands = 0 : i64, tpu.core_type = #tpu.core_type<tc>, window_params = [{pipeline_mode = #tpu.pipeline_mode<synchronous>, transform_indices = @transform_0, window_bounds = array<i64: 256, 300>}, {transform_indices = @transform_1, window_bounds = array<i64: 8, 300>}]} {
    %c8_i32 = arith.constant 8 : i32
    %0 = arith.muli %arg0, %c8_i32 : i32
    %c0_i32 = arith.constant 0 : i32
    %1 = arith.addi %0, %c0_i32 : i32
    %2 = arith.index_cast %1 : i32 to index
    %3 = memref.load %arg1[%2] : memref<16xi32, #tpu.memory_space<smem>>
    %4 = arith.index_cast %3 : i32 to index
    %c0 = arith.constant 0 : index
    %5 = vector.load %arg2[%4, %c0] : memref<256x300xf32, #tpu.memory_space<vmem>>, vector<1x300xf32>
    %6 = arith.index_cast %c0_i32 : i32 to index
    %c0_0 = arith.constant 0 : index
    %7 = vector.load %arg3[%6, %c0_0] : memref<8x300xf32, #tpu.memory_space<vmem>>, vector<1x300xf32>
    tpu.vector_store %arg3[%6, %c0_0], %5 {strides = array<i32>} : memref<8x300xf32, #tpu.memory_space<vmem>>, vector<1x300xf32>,
    %c1_i32 = arith.constant 1 : i32
    %8 = arith.addi %0, %c1_i32 : i32
    %9 = arith.index_cast %8 : i32 to index
    %10 = memref.load %arg1[%9] : memref<16xi32, #tpu.memory_space<smem>>
    %11 = arith.index_cast %10 : i32 to index
    %c0_1 = arith.constant 0 : index
    %12 = vector.load %arg2[%11, %c0_1] : memref<256x300xf32, #tpu.memory_space<vmem>>, vector<1x300xf32>
    %13 = arith.index_cast %c1_i32 : i32 to index
    %c0_2 = arith.constant 0 : index
    %14 = vector.load %arg3[%13, %c0_2] : memref<8x300xf32, #tpu.memory_space<vmem>>, vector<1x300xf32>
    tpu.vector_store %arg3[%13, %c0_2], %12 {strides = array<i32>} : memref<8x300xf32, #tpu.memory_space<vmem>>, vector<1x300xf32>,
    %c2_i32 = arith.constant 2 : i32
    %15 = arith.addi %0, %c2_i32 : i32
    %16 = arith.index_cast %15 : i32 to index
    %17 = memref.load %arg1[%16] : memref<16xi32, #tpu.memory_space<smem>>
    %18 = arith.index_cast %17 : i32 to index
    %c0_3 = arith.constant 0 : index
    %19 = vector.load %arg2[%18, %c0_3] : memref<256x300xf32, #tpu.memory_space<vmem>>, vector<1x300xf32>
    %20 = arith.index_cast %c2_i32 : i32 to index
    %c0_4 = arith.constant 0 : index
    %21 = vector.load %arg3[%20, %c0_4] : memref<8x300xf32, #tpu.memory_space<vmem>>, vector<1x300xf32>
    tpu.vector_store %arg3[%20, %c0_4], %19 {strides = array<i32>} : memref<8x300xf32, #tpu.memory_space<vmem>>, vector<1x300xf32>,
    %c3_i32 = arith.constant 3 : i32
    %22 = arith.addi %0, %c3_i32 : i32
    %23 = arith.index_cast %22 : i32 to index
    %24 = memref.load %arg1[%23] : memref<16xi32, #tpu.memory_space<smem>>
    %25 = arith.index_cast %24 : i32 to index
    %c0_5 = arith.constant 0 : index
    %26 = vector.load %arg2[%25, %c0_5] : memref<256x300xf32, #tpu.memory_space<vmem>>, vector<1x300xf32>
    %27 = arith.index_cast %c3_i32 : i32 to index
    %c0_6 = arith.constant 0 : index
    %28 = vector.load %arg3[%27, %c0_6] : memref<8x300xf32, #tpu.memory_space<vmem>>, vector<1x300xf32>
    tpu.vector_store %arg3[%27, %c0_6], %26 {strides = array<i32>} : memref<8x300xf32, #tpu.memory_space<vmem>>, vector<1x300xf32>,
    %c4_i32 = arith.constant 4 : i32
    %29 = arith.addi %0, %c4_i32 : i32
    %30 = arith.index_cast %29 : i32 to index
    %31 = memref.load %arg1[%30] : memref<16xi32, #tpu.memory_space<smem>>
    %32 = arith.index_cast %31 : i32 to index
    %c0_7 = arith.constant 0 : index
    %33 = vector.load %arg2[%32, %c0_7] : memref<256x300xf32, #tpu.memory_space<vmem>>, vector<1x300xf32>
    %34 = arith.index_cast %c4_i32 : i32 to index
    %c0_8 = arith.constant 0 : index
    %35 = vector.load %arg3[%34, %c0_8] : memref<8x300xf32, #tpu.memory_space<vmem>>, vector<1x300xf32>
    tpu.vector_store %arg3[%34, %c0_8], %33 {strides = array<i32>} : memref<8x300xf32, #tpu.memory_space<vmem>>, vector<1x300xf32>,
    %c5_i32 = arith.constant 5 : i32
    %36 = arith.addi %0, %c5_i32 : i32
    %37 = arith.index_cast %36 : i32 to index
    %38 = memref.load %arg1[%37] : memref<16xi32, #tpu.memory_space<smem>>
    %39 = arith.index_cast %38 : i32 to index
    %c0_9 = arith.constant 0 : index
    %40 = vector.load %arg2[%39, %c0_9] : memref<256x300xf32, #tpu.memory_space<vmem>>, vector<1x300xf32>
    %41 = arith.index_cast %c5_i32 : i32 to index
    %c0_10 = arith.constant 0 : index
    %42 = vector.load %arg3[%41, %c0_10] : memref<8x300xf32, #tpu.memory_space<vmem>>, vector<1x300xf32>
    tpu.vector_store %arg3[%41, %c0_10], %40 {strides = array<i32>} : memref<8x300xf32, #tpu.memory_space<vmem>>, vector<1x300xf32>,
    %c6_i32 = arith.constant 6 : i32
    %43 = arith.addi %0, %c6_i32 : i32
    %44 = arith.index_cast %43 : i32 to index
    %45 = memref.load %arg1[%44] : memref<16xi32, #tpu.memory_space<smem>>
    %46 = arith.index_cast %45 : i32 to index
    %c0_11 = arith.constant 0 : index
    %47 = vector.load %arg2[%46, %c0_11] : memref<256x300xf32, #tpu.memory_space<vmem>>, vector<1x300xf32>
    %48 = arith.index_cast %c6_i32 : i32 to index
    %c0_12 = arith.constant 0 : index
    %49 = vector.load %arg3[%48, %c0_12] : memref<8x300xf32, #tpu.memory_space<vmem>>, vector<1x300xf32>
    tpu.vector_store %arg3[%48, %c0_12], %47 {strides = array<i32>} : memref<8x300xf32, #tpu.memory_space<vmem>>, vector<1x300xf32>,
    %c7_i32 = arith.constant 7 : i32
    %50 = arith.addi %0, %c7_i32 : i32
    %51 = arith.index_cast %50 : i32 to index
    %52 = memref.load %arg1[%51] : memref<16xi32, #tpu.memory_space<smem>>
    %53 = arith.index_cast %52 : i32 to index
    %c0_13 = arith.constant 0 : index
    %54 = vector.load %arg2[%53, %c0_13] : memref<256x300xf32, #tpu.memory_space<vmem>>, vector<1x300xf32>
    %55 = arith.index_cast %c7_i32 : i32 to index
    %c0_14 = arith.constant 0 : index
    %56 = vector.load %arg3[%55, %c0_14] : memref<8x300xf32, #tpu.memory_space<vmem>>, vector<1x300xf32>
    tpu.vector_store %arg3[%55, %c0_14], %54 {strides = array<i32>} : memref<8x300xf32, #tpu.memory_space<vmem>>, vector<1x300xf32>,
    %c8_i32_15 = arith.constant 8 : i32
    return
  }
  func.func @transform_0(%arg0: i32, %arg1: memref<16xi32, #tpu.memory_space<smem>>) -> (i32, i32) {
    %c0_i32 = arith.constant 0 : i32
    %c0_i32_0 = arith.constant 0 : i32
    %c0_i32_1 = arith.constant 0 : i32
    return %c0_i32, %c0_i32_0 : i32, i32
  }
  func.func @transform_1(%arg0: i32, %arg1: memref<16xi32, #tpu.memory_space<smem>>) -> (i32, i32) {
    %c0_i32 = arith.constant 0 : i32
    %c0_i32_0 = arith.constant 0 : i32
    return %arg0, %c0_i32 : i32, i32
  }
}

</mosaic_0001>

<llo_original>
// kernel: tpu_custom_call.1
$region0: #{tpu_custom_call.1}
  #allocation0 [shape = 'u32[]', space=smem, size = 0x4, offset = 0x4, fixed_abs, tag = 'smem constant byte address 0x4 - core index']
  #allocation1 [shape = 'u32[144,128]{1,0:T(1,128)}', space=vmem, size = 0x12000, scoped, tag = 'internal scratch']
  #allocation2 [shape = 's32[1]{0}', space=sflag, size = 0x4, scoped, tag = 'scoped memory for tpu_custom_call.1']
  #allocation3 [shape = 'u8[512]{0}', space=smem, size = 0x200, scoped, tag = 'prefetched SMEM operand 0']
  %s0 = inlined_call_operand.vmem [shape: s32[16], index: 0, kind: input, shape index: {}]
  %s1 = inlined_call_operand.vmem [shape: f32[256,300], index: 1, kind: input, shape index: {}]
  %s2 = inlined_call_operand.hbm [shape: f32[16,300], index: 2, kind: output, shape index: {}]
  %s3 = sld [smem:[#allocation0]]
  $region37: #{tpu_custom_call.1} parent=0
    _
  %s5 = ssub.s32 1, %s3
  %s6 = scalar_select 0, %s5, %s3
  %s7 = sshll.u32 %s0, 4
  %s8 = int_to_ptr.vmem [resolvable:$true] %s7
  %10 = dma.vmem_to_smem %s8, 16, [#allocation3], [#allocation2]
  %11 = dma.done [#allocation2], 16
  %12 = sfence
  $region1: #{tpu_custom_call.1} parent=0
    #allocation4 [shape = 'u8[24576]{0}', space=vmem, size = 0x6000, scoped, tag = 'output window, operand 0']
    #allocation5 [shape = 's32[2]{0}', space=sflag, size = 0x8, scoped, tag = 'scoped memory for tpu_custom_call.1']
    %13 = vsyncpa [#allocation5], 0
    %s14 = scalar_lea.sflag [#allocation5], 1
    %15 = vsyncpa %s14, 0
    loop: start=0, step=1, limit=4
    $region2: #{tpu_custom_call.1} parent=1 // loop_pre_header
      _
    $region3: #{tpu_custom_call.1} parent=1 // loop_header
      %s17 = sphi 0, %s21
      %p18 = scmp.ge.s32.totalorder %s17, 4
      %s25 = sphi 0, %s25
      %s27 = sphi 0, %s25
      %s28 = sphi 0, %s27
      %s42 = sphi 0, %s28
      %s48 = sphi 0, %s50
      %s51 = sphi 0, %s48
      %s52 = sphi 0, %s51
      %s68 = sphi 0, %s52
    $region4: #{tpu_custom_call.1} parent=1 // loop_header_branch
      %20 = sbr.rel (%p18) target = $region8
    $region5: #{tpu_custom_call.1} parent=1 // loop_body
      %s22 = ssub.s32 %s17, 1
      %s23 = ssub.s32 %s17, 2
      %s24 = sadd.s32 %s17, 1
      %s26 = sadd.s32 %s25, 1
      %p29 = scmp.eq.s32.totalorder %s17, 1
      %p30 = scmp.ne.s32.totalorder %s25, %s27
      %p31 = scmp.eq.s32.totalorder %s17, 0
      %p32 = por %p30, %p31
      %p33 = scmp.ne.s32.totalorder %s25, %s27
      %p34 = scmp.eq.s32.totalorder %s22, 1
      %p35 = por %p33, %p34
      %p36 = scmp.ne.s32.totalorder %s27, %s28
      %p37 = scmp.eq.s32.totalorder %s22, 0
      %p38 = por %p36, %p37
      %p39 = scmp.ne.s32.totalorder %s27, %s28
      %p40 = scmp.eq.s32.totalorder %s23, 1
      %p41 = por %p39, %p40
      %p43 = scmp.ne.s32.totalorder %s28, %s42
      %p44 = scmp.eq.s32.totalorder %s23, 0
      %p45 = por %p43, %p44
      %s46 = ssub.s32 %s17, %s24
      %p47 = scmp.eq.s32.totalorder %s46, 0
      %s49 = sadd.s32 %s48, 1
      %s50 = scalar_select %p47, %s48, %s49
      %p53 = pneg %p47
      %p54 = scmp.eq.s32.totalorder %s17, 1
      %p55 = por %p53, %p54
      %p56 = scmp.ne.s32.totalorder %s48, %s51
      %p57 = scmp.eq.s32.totalorder %s17, 0
      %p58 = por %p56, %p57
      %p59 = scmp.ne.s32.totalorder %s48, %s51
      %p60 = scmp.eq.s32.totalorder %s22, 1
      %p61 = por %p59, %p60
      %p62 = scmp.ne.s32.totalorder %s51, %s52
      %p63 = scmp.eq.s32.totalorder %s22, 0
      %p64 = por %p62, %p63
      %p65 = scmp.ne.s32.totalorder %s51, %s52
      %p66 = scmp.eq.s32.totalorder %s23, 1
      %p67 = por %p65, %p66
      %p69 = scmp.ne.s32.totalorder %s52, %s68
      %p70 = scmp.eq.s32.totalorder %s23, 0
      %p71 = por %p69, %p70
      %p72 = scmp.le.s32.totalorder 1, %s17
      %p73 = scmp.lt.s32.totalorder %s17, 3
      %p74 = pnand %p72, %p73
      %p75 = pneg %p74
      // Predicated region
      $region9: #{tpu_custom_call.1} parent=5 // pred_check
        _
      $region10: #{tpu_custom_call.1} parent=5 // pred_check_branch
        %77 = sbr.rel (%p74) target = $region12
      $region11: #{tpu_custom_call.1} parent=5 // pred_region
        %s78 = ssub.s32 %s17, 1
        // Predicated region
        $region13: #{tpu_custom_call.1} parent=11 // pred_check
          %p79 = pneg %p38
        $region14: #{tpu_custom_call.1} parent=11 // pred_check_branch
          %81 = sbr.rel (%p79) target = $region16
        $region15: #{tpu_custom_call.1} parent=11 // pred_region
          _
        $region16: #{tpu_custom_call.1} parent=11 // pred_fallthru
          _
      $region12: #{tpu_custom_call.1} parent=5 // pred_fallthru
        _
      %p82 = scmp.lt.s32.totalorder %s17, 2
      // Predicated region
      $region17: #{tpu_custom_call.1} parent=5 // pred_check
        %p83 = pneg %p82
      $region18: #{tpu_custom_call.1} parent=5 // pred_check_branch
        %85 = sbr.rel (%p83) target = $region20
      $region19: #{tpu_custom_call.1} parent=5 // pred_region
        _
      $region20: #{tpu_custom_call.1} parent=5 // pred_fallthru
        _
      %p86 = scmp.le.s32.totalorder 1, %s17
      %p87 = scmp.lt.s32.totalorder %s17, 3
      %p88 = pnand %p86, %p87
      %p89 = pneg %p88
      // Predicated region
      $region21: #{tpu_custom_call.1} parent=5 // pred_check
        _
      $region22: #{tpu_custom_call.1} parent=5 // pred_check_branch
        %91 = sbr.rel (%p88) target = $region24
      $region23: #{tpu_custom_call.1} parent=5 // pred_region
        %s92 = ssub.s32 %s17, 1
        %p93 = pneg %p38
        %p94 = pneg %p35
        %p95 = pneg %p64
        %p96 = pneg %p61
        %s97 = sand.u32 %s51, 1
        %s98 = scalar_lea.sflag [#allocation5], %s97
        %s99 = sand.u32 %s51, 1
        %s100 = smul.addr %s99, 24
        %s101 = scalar_lea.vmem [#allocation4], %s100
        %s102 = smul.u32 %s22, 8
        %s103 = sld [smem:[#allocation3 + %s102]]
        %s104 = sshra.s32 %s103, 3
        %s105 = sand.u32 %s103, 7
        %s106 = sshra.s32 %s103, 3
        %s107 = sand.u32 %s103, 7
        %s108 = smul.u32 %s104, 3
        %s109 = smul.u32 %s108, 8
        %s110 = sadd.s32 %s109, %s107
        %s111 = scalar_lea.vmem %s1, %s110
        %v112 = vld [vmem:[%s111] ss:$8 sm:$0x7]
        %v113 = vlaneseq
        %vm114 = vcmp.ge.s32.totalorder %v113, 0
        %vm115 = vcmp.lt.s32.totalorder %v113, 300
        %vm116 = vmand %vm114, %vm115
        %117 = vst.msk [vmem:[%s101] ss:$8 sm:$0x7] %vm116, %v112
        %118 = vst.msk [vmem:[%s101] ss:$8 sm:$0x0] %vm116, %v112
        %s119 = sadd.s32 %s102, 1
        %s120 = sld [smem:[#allocation3 + %s119]]
        %s121 = sshra.s32 %s120, 3
        %s122 = sand.u32 %s120, 7
        %s123 = sshra.s32 %s120, 3
        %s124 = sand.u32 %s120, 7
        %s125 = smul.u32 %s121, 3
        %s126 = smul.u32 %s125, 8
        %s127 = sadd.s32 %s126, %s124
        %s128 = scalar_lea.vmem %s1, %s127
        %v129 = vld [vmem:[%s128] ss:$8 sm:$0x7]
        %s130 = scalar_lea.vmem %s101, 1 [#allocation4]
        %131 = vst.msk [vmem:[%s130] ss:$8 sm:$0x7] %vm116, %v129
        %132 = vst.msk [vmem:[%s130] ss:$8 sm:$0x0] %vm116, %v129
        %s133 = sadd.s32 %s102, 2
        %s134 = sld [smem:[#allocation3 + %s133]]
        %s135 = sshra.s32 %s134, 3
        %s136 = sand.u32 %s134, 7
        %s137 = sshra.s32 %s134, 3
        %s138 = sand.u32 %s134, 7
        %s139 = smul.u32 %s135, 3
        %s140 = smul.u32 %s139, 8
        %s141 = sadd.s32 %s140, %s138
        %s142 = scalar_lea.vmem %s1, %s141
        %v143 = vld [vmem:[%s142] ss:$8 sm:$0x7]
        %s144 = scalar_lea.vmem %s101, 2 [#allocation4]
        %145 = vst.msk [vmem:[%s144] ss:$8 sm:$0x7] %vm116, %v143
        %146 = vst.msk [vmem:[%s144] ss:$8 sm:$0x0] %vm116, %v143
        %s147 = sadd.s32 %s102, 3
        %s148 = sld [smem:[#allocation3 + %s147]]
        %s149 = sshra.s32 %s148, 3
        %s150 = sand.u32 %s148, 7
        %s151 = sshra.s32 %s148, 3
        %s152 = sand.u32 %s148, 7
        %s153 = smul.u32 %s149, 3
        %s154 = smul.u32 %s153, 8
        %s155 = sadd.s32 %s154, %s152
        %s156 = scalar_lea.vmem %s1, %s155
        %v157 = vld [vmem:[%s156] ss:$8 sm:$0x7]
        %s158 = scalar_lea.vmem %s101, 3 [#allocation4]
        %159 = vst.msk [vmem:[%s158] ss:$8 sm:$0x7] %vm116, %v157
        %160 = vst.msk [vmem:[%s158] ss:$8 sm:$0x0] %vm116, %v157
        %s161 = sadd.s32 %s102, 4
        %s162 = sld [smem:[#allocation3 + %s161]]
        %s163 = sshra.s32 %s162, 3
        %s164 = sand.u32 %s162, 7
        %s165 = sshra.s32 %s162, 3
        %s166 = sand.u32 %s162, 7
        %s167 = smul.u32 %s163, 3
        %s168 = smul.u32 %s167, 8
        %s169 = sadd.s32 %s168, %s166
        %s170 = scalar_lea.vmem %s1, %s169
        %v171 = vld [vmem:[%s170] ss:$8 sm:$0x7]
        %s172 = scalar_lea.vmem %s101, 4 [#allocation4]
        %173 = vst.msk [vmem:[%s172] ss:$8 sm:$0x7] %vm116, %v171
        %174 = vst.msk [vmem:[%s172] ss:$8 sm:$0x0] %vm116, %v171
        %s175 = sadd.s32 %s102, 5
        %s176 = sld [smem:[#allocation3 + %s175]]
        %s177 = sshra.s32 %s176, 3
        %s178 = sand.u32 %s176, 7
        %s179 = sshra.s32 %s176, 3
        %s180 = sand.u32 %s176, 7
        %s181 = smul.u32 %s177, 3
        %s182 = smul.u32 %s181, 8
        %s183 = sadd.s32 %s182, %s180
        %s184 = scalar_lea.vmem %s1, %s183
        %v185 = vld [vmem:[%s184] ss:$8 sm:$0x7]
        %s186 = scalar_lea.vmem %s101, 5 [#allocation4]
        %187 = vst.msk [vmem:[%s186] ss:$8 sm:$0x7] %vm116, %v185
        %188 = vst.msk [vmem:[%s186] ss:$8 sm:$0x0] %vm116, %v185
        %s189 = sadd.s32 %s102, 6
        %s190 = sld [smem:[#allocation3 + %s189]]
        %s191 = sshra.s32 %s190, 3
        %s192 = sand.u32 %s190, 7
        %s193 = sshra.s32 %s190, 3
        %s194 = sand.u32 %s190, 7
        %s195 = smul.u32 %s191, 3
        %s196 = smul.u32 %s195, 8
        %s197 = sadd.s32 %s196, %s194
        %s198 = scalar_lea.vmem %s1, %s197
        %v199 = vld [vmem:[%s198] ss:$8 sm:$0x7]
        %s200 = scalar_lea.vmem %s101, 6 [#allocation4]
        %201 = vst.msk [vmem:[%s200] ss:$8 sm:$0x7] %vm116, %v199
        %202 = vst.msk [vmem:[%s200] ss:$8 sm:$0x0] %vm116, %v199
        %s203 = sadd.s32 %s102, 7
        %s204 = sld [smem:[#allocation3 + %s203]]
        %s205 = sshra.s32 %s204, 3
        %s206 = sand.u32 %s204, 7
        %s207 = sshra.s32 %s204, 3
        %s208 = sand.u32 %s204, 7
        %s209 = smul.u32 %s205, 3
        %s210 = smul.u32 %s209, 8
        %s211 = sadd.s32 %s210, %s208
        %s212 = scalar_lea.vmem %s1, %s211
        %v213 = vld [vmem:[%s212] ss:$8 sm:$0x7]
        %s214 = scalar_lea.vmem %s101, 7 [#allocation4]
        %215 = vst.msk [vmem:[%s214] ss:$8 sm:$0x7] %vm116, %v213
        %216 = vst.msk [vmem:[%s214] ss:$8 sm:$0x0] %vm116, %v213
        %s217 = sand.u32 %s51, 1
        %s218 = scalar_lea.sflag [#allocation5], %s217
        %s219 = sand.u32 %s51, 1
        %s220 = smul.addr %s219, 24
        %s221 = scalar_lea.vmem [#allocation4], %s220
        // Predicated region
        $region25: #{tpu_custom_call.1} parent=23 // pred_check
          %p222 = pneg %p61
        $region26: #{tpu_custom_call.1} parent=23 // pred_check_branch
          %224 = sbr.rel (%p222) target = $region28
        $region27: #{tpu_custom_call.1} parent=23 // pred_region
          %s226 = ssub.s32 384, 384
          %227 = vsyncadd %s218, %s226
          %s228 = smul.addr %s22, 3
          %s229 = smul.addr %s228, 128
          %s230 = scalar_lea.hbm %s2, %s229
          %s232 = sshll.u32 %s221, 4
          %s233 = int_to_ptr.vmem [resolvable:$true] %s232
          %235 = dma.vmem_to_hbm [thread:$0]  %s233, 384, %s230, %s218
        $region28: #{tpu_custom_call.1} parent=23 // pred_fallthru
          _
      $region24: #{tpu_custom_call.1} parent=5 // pred_fallthru
        _
      %p236 = scmp.le.s32.totalorder 2, %s17
      // Predicated region
      $region29: #{tpu_custom_call.1} parent=5 // pred_check
        %p237 = pneg %p236
      $region30: #{tpu_custom_call.1} parent=5 // pred_check_branch
        %239 = sbr.rel (%p237) target = $region32
      $region31: #{tpu_custom_call.1} parent=5 // pred_region
        %s240 = ssub.s32 %s17, 2
        // Predicated region
        $region33: #{tpu_custom_call.1} parent=31 // pred_check
          %p241 = pneg %p67
        $region34: #{tpu_custom_call.1} parent=31 // pred_check_branch
          %243 = sbr.rel (%p241) target = $region36
        $region35: #{tpu_custom_call.1} parent=31 // pred_region
          %s244 = sand.u32 %s52, 1
          %s245 = scalar_lea.sflag [#allocation5], %s244
          %s246 = sand.u32 %s52, 1
          %s247 = smul.addr %s246, 24
          %s248 = scalar_lea.vmem [#allocation4], %s247
          %249 = dma.done %s245, 384
        $region36: #{tpu_custom_call.1} parent=31 // pred_fallthru
          _
      $region32: #{tpu_custom_call.1} parent=5 // pred_fallthru
        _
    $region6: #{tpu_custom_call.1} parent=1 // loop_footer
      %s21 = sadd.s32 1, %s17
    $region7: #{tpu_custom_call.1} parent=1 // loop_footer_branch
      %16 = sbr.rel target = $region3
    $region8: #{tpu_custom_call.1} parent=1 // loop_exit
      _
    %250 = vsyncpa [#allocation5], 1
    %s251 = scalar_lea.sflag [#allocation5], 1
    %252 = vsyncpa %s251, 1

</llo_original>
